<compile_context>
chip_gen: v6e
topology: v6e:2x2x1
jax: 0.10.0
libtpu: 0.0.40
codegen_flags: <defaults>
</compile_context>

<pallas_src>
import functools

import jax
import jax.numpy as jnp
from jax import lax
from jax.experimental import pallas as pl
from jax.experimental.pallas import tpu as pltpu


def temporal_attention_kernel(cur_ref, prev_ref,
                              w1a_ref, w1b_ref, b1_ref,
                              w2_ref, b2_ref,
                              out_ref, *, chunk):
    # Block refs are (C, tile): channels on sublanes, pixels on lanes.
    C = cur_ref.shape[0]
    tile = cur_ref.shape[1]

    # Small grid-resident operands: load once per grid step.
    w1a = w1a_ref[...]
    w1b = w1b_ref[...]
    w2 = w2_ref[...]
    # Hoist the (C,1) -> (C,chunk) bias broadcasts out of the strip loop.
    b1 = jnp.broadcast_to(b1_ref[...], (C, chunk))
    b2 = jnp.broadcast_to(b2_ref[...], (C, chunk))

    def process(start, width):
        cur = cur_ref[:, pl.ds(start, width)]
        prev = prev_ref[:, pl.ds(start, width)]
        # 1x1 conv (2C -> C): [W1a | W1b] @ [cur ; prev] == W1a@cur + W1b@prev
        z = (jnp.dot(w1a, cur, preferred_element_type=jnp.float32)
             + jnp.dot(w1b, prev, preferred_element_type=jnp.float32)
             + b1[:, :width])
        # LeakyReLU(0.2)
        a = jnp.where(z > 0, z, 0.2 * z)
        # 1x1 conv (C -> C)
        h = jnp.dot(w2, a, preferred_element_type=jnp.float32) + b2[:, :width]
        # Sigmoid gate applied to `current`
        att = jax.nn.sigmoid(h)
        out_ref[:, pl.ds(start, width)] = (
            att * cur.astype(jnp.float32)).astype(out_ref.dtype)

    n_full = tile // chunk
    rem = tile - n_full * chunk

    if n_full == 1:
        process(0, chunk)
    elif n_full > 1:
        def body(s, carry):
            process(pl.multiple_of(s * chunk, 128), chunk)
            return carry
        lax.fori_loop(0, n_full, body, 0,
                      unroll=True if n_full <= 8 else 8)
    if rem > 0:
        process(n_full * chunk, rem)   # static-start, static-width tail


def _round_up(x, m):
    return ((x + m - 1) // m) * m


def _plan(N, C, HW, itemsize, tile_hw=None):
    """Pick (tile, chunk, vmem_cap_limit), generation-aware."""
    try:
        vmem_cap = int(pltpu.get_tpu_info().vmem_capacity_bytes)
    except Exception:
        vmem_cap = 128 << 20
    small_vmem = vmem_cap <= (64 << 20)          # v7x per-TC VMEM
    target_bytes = (2 << 20) if small_vmem else (4 << 20)
    vmem_cap_limit = (32 << 20) if small_vmem else (64 << 20)

    # Lane strip width such that ~6 live (C, chunk) f32 temporaries fit in the
    # 64 x 4 KiB vector register file (C padded to the sublane width).
    c_pad = max(8, _round_up(C, 8))
    chunk = max(128, min(2048, ((4096 // c_pad) // 128) * 128))

    lanes = tile_hw if tile_hw is not None else target_bytes // max(1, C * itemsize)
    lanes = max(chunk, (lanes // chunk) * chunk)

    # Full-extent block (always legal) when the whole pixel axis fits the budget;
    # otherwise a chunk-aligned tile with a Pallas-masked trailing partial block.
    tile = HW if lanes >= HW else lanes

    # v7x megacore: ensure >= 2 parallel grid programs when the input allows it.
    if N * pl.cdiv(HW, tile) < 2 and HW >= 256:
        tile = max(128, _round_up(pl.cdiv(HW, 2), 128))

    chunk = min(chunk, tile)
    return tile, chunk, vmem_cap_limit


def temporal_attention(current, previous, params, *, tile_hw=None):
    """current, previous: (N, C, H, W) float32.  Returns (N, C, H, W)."""
    w1, b1, w2, b2 = params["w1"], params["b1"], params["w2"], params["b2"]
    N, C, H, W = current.shape
    HW = H * W
    itemsize = jnp.dtype(current.dtype).itemsize

    # NCHW -> (N, C, H*W): free contiguous reshape; no transpose, no padding.
    cur = current.reshape(N, C, HW)
    prev = previous.reshape(N, C, HW)

    tile, chunk, vmem_cap_limit = _plan(N, C, HW, itemsize, tile_hw)
    grid = (N, pl.cdiv(HW, tile))

    # Conv2d weight is (C_out, C_in, 1, 1); used in native orientation (W @ x).
    # Split the 2C->C weight by input-channel half (torch.cat order: [cur, prev]).
    w1a = w1[:, :C, 0, 0]          # (C, C) acts on `current`
    w1b = w1[:, C:, 0, 0]          # (C, C) acts on `previous`
    w2m = w2[:, :, 0, 0]           # (C, C)
    b1c = b1.reshape(C, 1)
    b2c = b2.reshape(C, 1)

    row_spec = pl.BlockSpec((None, C, tile), lambda n, j: (n, 0, j))
    mat_spec = pl.BlockSpec((C, C), lambda n, j: (0, 0))
    bias_spec = pl.BlockSpec((C, 1), lambda n, j: (0, 0))

    # VMEM budget: double-buffered cur/prev/out blocks + weights + the strip-mined
    # in-kernel temporaries (z/a/h/att/cur/prev, sublane-padded), with headroom,
    # capped per-generation (<=50% of v7x's 64 MiB per-TC VMEM).
    block_bytes = C * tile * itemsize
    weight_bytes = (3 * C * C + 2 * C) * 4
    c_pad = max(8, _round_up(C, 8))
    temp_bytes = 8 * c_pad * chunk * 4
    need = 3 * 2 * block_bytes + 2 * weight_bytes + temp_bytes
    vmem_limit = int(min(max(int(need * 1.5) + (2 << 20), 16 << 20),
                         vmem_cap_limit))

    kernel = functools.partial(temporal_attention_kernel, chunk=chunk)

    out_flat = pl.pallas_call(
        kernel,
        out_shape=jax.ShapeDtypeStruct((N, C, HW), current.dtype),
        grid_spec=pltpu.PrefetchScalarGridSpec(
            num_scalar_prefetch=0,
            grid=grid,
            in_specs=[row_spec, row_spec, mat_spec, mat_spec, bias_spec,
                      mat_spec, bias_spec],
            out_specs=row_spec,
        ),
        compiler_params=pltpu.CompilerParams(
            dimension_semantics=("parallel", "parallel"),
            vmem_limit_bytes=vmem_limit),
    )(cur, prev, w1a, w1b, b1c, w2m, b2c)

    return out_flat.reshape(N, C, H, W)


def init_params(key, channels):
    k1, k2, k3, k4 = jax.random.split(key, 4)
    fan1 = 2 * channels
    fan2 = channels
    w1 = jax.random.uniform(k1, (channels, 2 * channels, 1, 1),
                            minval=-1.0, maxval=1.0) / jnp.sqrt(fan1)
    b1 = jax.random.uniform(k2, (channels,), minval=-1.0, maxval=1.0) / jnp.sqrt(fan1)
    w2 = jax.random.uniform(k3, (channels, channels, 1, 1),
                            minval=-1.0, maxval=1.0) / jnp.sqrt(fan2)
    b2 = jax.random.uniform(k4, (channels,), minval=-1.0, maxval=1.0) / jnp.sqrt(fan2)
    return {"w1": w1.astype(jnp.float32), "b1": b1.astype(jnp.float32),
            "w2": w2.astype(jnp.float32), "b2": b2.astype(jnp.float32)}


def reference(current, previous, params):
    """Pure-JAX reference matching the PyTorch forward."""
    w1, b1, w2, b2 = params["w1"], params["b1"], params["w2"], params["b2"]
    x = jnp.concatenate([current, previous], axis=1)               # (N, 2C, H, W)
    z = jnp.einsum("nihw,oi->nohw", x, w1[:, :, 0, 0]) + b1[None, :, None, None]
    a = jnp.where(z > 0, z, 0.2 * z)
    h = jnp.einsum("nihw,oi->nohw", a, w2[:, :, 0, 0]) + b2[None, :, None, None]
    att = jax.nn.sigmoid(h)
    return att * current


if __name__ == "__main__":
    key = jax.random.PRNGKey(0)
    kc, kp, kw = jax.random.split(key, 3)

    N, C, H, W = 2, 4, 16, 16
    current = jax.random.normal(kc, (N, C, H, W), dtype=jnp.float32)
    previous = jax.random.normal(kp, (N, C, H, W), dtype=jnp.float32)
    params = init_params(kw, C)

    out = temporal_attention(current, previous, params)
    out = jax.block_until_ready(out)

    ref = jax.block_until_ready(reference(current, previous, params))
    assert out.shape == (N, C, H, W)
    assert jnp.allclose(out, ref, atol=1e-5, rtol=1e-5), "mismatch vs reference"

    print("KERNEL_OK")
</pallas_src>

<mosaic_0001>
module attributes {stable_mosaic.version = 11 : i64} {
  func.func @temporal_attention_kernel(%arg0: i32, %arg1: i32, %arg2: memref<1x4x256xf32, #tpu.memory_space<vmem>>, %arg3: memref<1x4x256xf32, #tpu.memory_space<vmem>>, %arg4: memref<4x4xf32, #tpu.memory_space<vmem>>, %arg5: memref<4x4xf32, #tpu.memory_space<vmem>>, %arg6: memref<4x1xf32, #tpu.memory_space<vmem>>, %arg7: memref<4x4xf32, #tpu.memory_space<vmem>>, %arg8: memref<4x1xf32, #tpu.memory_space<vmem>>, %arg9: memref<1x4x256xf32, #tpu.memory_space<vmem>>) attributes {dimension_semantics = [#tpu.dimension_semantics<parallel>, #tpu.dimension_semantics<parallel>], iteration_bounds = array<i64: 2, 1>, scalar_prefetch = 0 : i64, scratch_operands = 0 : i64, tpu.core_type = #tpu.core_type<tc>, window_params = [{transform_indices = @transform_0, window_bounds = array<i64: 1, 4, 256>}, {transform_indices = @transform_1, window_bounds = array<i64: 1, 4, 256>}, {pipeline_mode = #tpu.pipeline_mode<synchronous>, transform_indices = @transform_2, window_bounds = array<i64: 4, 4>}, {pipeline_mode = #tpu.pipeline_mode<synchronous>, transform_indices = @transform_3, window_bounds = array<i64: 4, 4>}, {pipeline_mode = #tpu.pipeline_mode<synchronous>, transform_indices = @transform_4, window_bounds = array<i64: 4, 1>}, {pipeline_mode = #tpu.pipeline_mode<synchronous>, transform_indices = @transform_5, window_bounds = array<i64: 4, 4>}, {pipeline_mode = #tpu.pipeline_mode<synchronous>, transform_indices = @transform_6, window_bounds = array<i64: 4, 1>}, {transform_indices = @transform_7, window_bounds = array<i64: 1, 4, 256>}]} {
    %c0 = arith.constant 0 : index
    %c0_0 = arith.constant 0 : index
    %0 = vector.load %arg4[%c0, %c0_0] : memref<4x4xf32, #tpu.memory_space<vmem>>, vector<4x4xf32>
    %c0_1 = arith.constant 0 : index
    %c0_2 = arith.constant 0 : index
    %1 = vector.load %arg5[%c0_1, %c0_2] : memref<4x4xf32, #tpu.memory_space<vmem>>, vector<4x4xf32>
    %c0_3 = arith.constant 0 : index
    %c0_4 = arith.constant 0 : index
    %2 = vector.load %arg7[%c0_3, %c0_4] : memref<4x4xf32, #tpu.memory_space<vmem>>, vector<4x4xf32>
    %c0_5 = arith.constant 0 : index
    %c0_6 = arith.constant 0 : index
    %3 = vector.load %arg6[%c0_5, %c0_6] : memref<4x1xf32, #tpu.memory_space<vmem>>, vector<4x1xf32>
    %4 = vector.shape_cast %3 : vector<4x1xf32> to vector<4x1xf32>
    %5 = vector.broadcast %4 : vector<4x1xf32> to vector<4x256xf32>
    %c0_7 = arith.constant 0 : index
    %c0_8 = arith.constant 0 : index
    %6 = vector.load %arg8[%c0_7, %c0_8] : memref<4x1xf32, #tpu.memory_space<vmem>>, vector<4x1xf32>
    %7 = vector.shape_cast %6 : vector<4x1xf32> to vector<4x1xf32>
    %8 = vector.broadcast %7 : vector<4x1xf32> to vector<4x256xf32>
    %c0_9 = arith.constant 0 : index
    %c0_10 = arith.constant 0 : index
    %c0_11 = arith.constant 0 : index
    %9 = vector.load %arg2[%c0_9, %c0_10, %c0_11] : memref<1x4x256xf32, #tpu.memory_space<vmem>>, vector<1x4x256xf32>
    %10 = vector.shape_cast %9 : vector<1x4x256xf32> to vector<4x256xf32>
    %c0_12 = arith.constant 0 : index
    %c0_13 = arith.constant 0 : index
    %c0_14 = arith.constant 0 : index
    %11 = vector.load %arg3[%c0_12, %c0_13, %c0_14] : memref<1x4x256xf32, #tpu.memory_space<vmem>>, vector<1x4x256xf32>
    %12 = vector.shape_cast %11 : vector<1x4x256xf32> to vector<4x256xf32>
    %cst = arith.constant dense<0.000000e+00> : vector<4x256xf32>
    %13 = tpu.matmul %0, %10, %cst {dimension_numbers = #tpu.dot_dimension_numbers<[1], [0], [0], [1], [0, 0, 1, 1], [], []>} : vector<4x4xf32>, vector<4x256xf32>, vector<4x256xf32> -> vector<4x256xf32>
    %cst_15 = arith.constant dense<0.000000e+00> : vector<4x256xf32>
    %14 = tpu.matmul %1, %12, %cst_15 {dimension_numbers = #tpu.dot_dimension_numbers<[1], [0], [0], [1], [0, 0, 1, 1], [], []>} : vector<4x4xf32>, vector<4x256xf32>, vector<4x256xf32> -> vector<4x256xf32>
    %15 = arith.addf %13, %14 : vector<4x256xf32>
    %16 = arith.addf %15, %5 : vector<4x256xf32>
    %cst_16 = arith.constant 0.000000e+00 : f32
    %17 = vector.broadcast %cst_16 : f32 to vector<4x256xf32>
    %18 = arith.cmpf ogt, %16, %17 : vector<4x256xf32>
    %cst_17 = arith.constant 2.000000e-01 : f32
    %19 = vector.broadcast %cst_17 : f32 to vector<4x256xf32>
    %20 = arith.mulf %19, %16 : vector<4x256xf32>
    %21 = arith.select %18, %16, %20 : vector<4x256xi1>, vector<4x256xf32>
    %cst_18 = arith.constant dense<0.000000e+00> : vector<4x256xf32>
    %22 = tpu.matmul %2, %21, %cst_18 {dimension_numbers = #tpu.dot_dimension_numbers<[1], [0], [0], [1], [0, 0, 1, 1], [], []>} : vector<4x4xf32>, vector<4x256xf32>, vector<4x256xf32> -> vector<4x256xf32>
    %23 = arith.addf %22, %8 : vector<4x256xf32>
    %24 = arith.negf %23 : vector<4x256xf32>
    %25 = math.exp %24 : vector<4x256xf32>
    %cst_19 = arith.constant 1.000000e+00 : f32
    %26 = vector.broadcast %cst_19 : f32 to vector<4x256xf32>
    %27 = arith.addf %26, %25 : vector<4x256xf32>
    %28 = arith.divf %26, %27 : vector<4x256xf32>
    %29 = arith.mulf %28, %10 : vector<4x256xf32>
    %c0_20 = arith.constant 0 : index
    %c0_21 = arith.constant 0 : index
    %c0_22 = arith.constant 0 : index
    %30 = vector.load %arg9[%c0_20, %c0_21, %c0_22] : memref<1x4x256xf32, #tpu.memory_space<vmem>>, vector<1x4x256xf32>
    %31 = vector.shape_cast %30 : vector<1x4x256xf32> to vector<4x256xf32>
    %32 = vector.shape_cast %29 : vector<4x256xf32> to vector<1x4x256xf32>
    tpu.vector_store %arg9[%c0_20, %c0_21, %c0_22], %32 {strides = array<i32>} : memref<1x4x256xf32, #tpu.memory_space<vmem>>, vector<1x4x256xf32>,
    return
  }
  func.func @transform_0(%arg0: i32, %arg1: i32) -> (i32, i32, i32) {
    %c0_i32 = arith.constant 0 : i32
    %c0_i32_0 = arith.constant 0 : i32
    return %arg0, %c0_i32, %arg1 : i32, i32, i32
  }
  func.func @transform_1(%arg0: i32, %arg1: i32) -> (i32, i32, i32) {
    %c0_i32 = arith.constant 0 : i32
    %c0_i32_0 = arith.constant 0 : i32
    return %arg0, %c0_i32, %arg1 : i32, i32, i32
  }
  func.func @transform_2(%arg0: i32, %arg1: i32) -> (i32, i32) {
    %c0_i32 = arith.constant 0 : i32
    %c0_i32_0 = arith.constant 0 : i32
    %c0_i32_1 = arith.constant 0 : i32
    return %c0_i32, %c0_i32_0 : i32, i32
  }
  func.func @transform_3(%arg0: i32, %arg1: i32) -> (i32, i32) {
    %c0_i32 = arith.constant 0 : i32
    %c0_i32_0 = arith.constant 0 : i32
    %c0_i32_1 = arith.constant 0 : i32
    return %c0_i32, %c0_i32_0 : i32, i32
  }
  func.func @transform_4(%arg0: i32, %arg1: i32) -> (i32, i32) {
    %c0_i32 = arith.constant 0 : i32
    %c0_i32_0 = arith.constant 0 : i32
    %c0_i32_1 = arith.constant 0 : i32
    return %c0_i32, %c0_i32_0 : i32, i32
  }
  func.func @transform_5(%arg0: i32, %arg1: i32) -> (i32, i32) {
    %c0_i32 = arith.constant 0 : i32
    %c0_i32_0 = arith.constant 0 : i32
    %c0_i32_1 = arith.constant 0 : i32
    return %c0_i32, %c0_i32_0 : i32, i32
  }
  func.func @transform_6(%arg0: i32, %arg1: i32) -> (i32, i32) {
    %c0_i32 = arith.constant 0 : i32
    %c0_i32_0 = arith.constant 0 : i32
    %c0_i32_1 = arith.constant 0 : i32
    return %c0_i32, %c0_i32_0 : i32, i32
  }
  func.func @transform_7(%arg0: i32, %arg1: i32) -> (i32, i32, i32) {
    %c0_i32 = arith.constant 0 : i32
    %c0_i32_0 = arith.constant 0 : i32
    return %arg0, %c0_i32, %arg1 : i32, i32, i32
  }
}

</mosaic_0001>

<llo_original>
// kernel: tpu_custom_call.1
$region0: #{tpu_custom_call.1}
  #allocation0 [shape = 'u32[]', space=smem, size = 0x4, offset = 0x4, fixed_abs, tag = 'smem constant byte address 0x4 - core index']
  #allocation1 [shape = 'u32[144,128]{1,0:T(1,128)}', space=vmem, size = 0x12000, scoped, tag = 'internal scratch']
  %s0 = inlined_call_operand.hbm [shape: f32[2,4,256], index: 0, kind: input, shape index: {}]
  %s1 = inlined_call_operand.hbm [shape: f32[2,4,256], index: 1, kind: input, shape index: {}]
  %s2 = inlined_call_operand.vmem [shape: f32[4,4], index: 2, kind: input, shape index: {}]
  %s3 = inlined_call_operand.vmem [shape: f32[4,4], index: 3, kind: input, shape index: {}]
  %s4 = inlined_call_operand.vmem [shape: f32[4,1], index: 4, kind: input, shape index: {}]
  %s5 = inlined_call_operand.vmem [shape: f32[4,4], index: 5, kind: input, shape index: {}]
  %s6 = inlined_call_operand.vmem [shape: f32[4,1], index: 6, kind: input, shape index: {}]
  %s7 = inlined_call_operand.hbm [shape: f32[2,4,256], index: 7, kind: output, shape index: {}]
  %s8 = sld [smem:[#allocation0]]
  $region69: #{tpu_custom_call.1} parent=0
    _
  %s10 = ssub.s32 1, %s8
  %s11 = scalar_select 0, %s10, %s8
  $region1: #{tpu_custom_call.1} parent=0
    #allocation2 [shape = 'u8[8192]{0}', space=vmem, size = 0x2000, scoped, tag = 'input window, operand 0']
    #allocation3 [shape = 's32[2]{0}', space=sflag, size = 0x8, scoped, tag = 'scoped memory for tpu_custom_call.1']
    #allocation4 [shape = 's32[2]{0}', space=sflag, size = 0x8, scoped, tag = 'scoped memory for tpu_custom_call.1']
    #allocation5 [shape = 'u8[8192]{0}', space=vmem, size = 0x2000, scoped, tag = 'input window, operand 1']
    #allocation6 [shape = 's32[2]{0}', space=sflag, size = 0x8, scoped, tag = 'scoped memory for tpu_custom_call.1']
    #allocation7 [shape = 'u8[8192]{0}', space=vmem, size = 0x2000, scoped, tag = 'output window, operand 0']
    %12 = vsyncpa [#allocation3], 0
    %s13 = scalar_lea.sflag [#allocation3], 1
    %14 = vsyncpa %s13, 0
    %15 = vsyncpa [#allocation6], 0
    %s16 = scalar_lea.sflag [#allocation6], 1
    %17 = vsyncpa %s16, 0
    %18 = vsyncpa [#allocation4], 0
    %s19 = scalar_lea.sflag [#allocation4], 1
    %20 = vsyncpa %s19, 0
    loop: start=0, step=1, limit=4
    $region2: #{tpu_custom_call.1} parent=1 // loop_pre_header
      _
    $region3: #{tpu_custom_call.1} parent=1 // loop_header
      %s22 = sphi 0, %s26
      %p23 = scmp.ge.s32.totalorder %s22, 4
      %s29 = sphi 0, %s41
      %s30 = sphi 0, %s37
      %s31 = sphi 0, %s29
      %s32 = sphi 0, %s30
      %s33 = sphi 0, %s31
      %s34 = sphi 0, %s32
      %s46 = sphi 0, %s48
      %s49 = sphi 0, %s46
      %s50 = sphi 0, %s49
      %s66 = sphi 0, %s50
      %s74 = sphi 0, %s76
      %s77 = sphi 0, %s74
      %s78 = sphi 0, %s77
      %s94 = sphi 0, %s78
      %s98 = sphi 0, %s98
      %s100 = sphi 0, %s98
      %s101 = sphi 0, %s100
      %s115 = sphi 0, %s101
      %s119 = sphi 0, %s119
      %s121 = sphi 0, %s119
      %s122 = sphi 0, %s121
      %s136 = sphi 0, %s122
      %s140 = sphi 0, %s140
      %s142 = sphi 0, %s140
      %s143 = sphi 0, %s142
      %s157 = sphi 0, %s143
      %s161 = sphi 0, %s161
      %s163 = sphi 0, %s161
      %s164 = sphi 0, %s163
      %s178 = sphi 0, %s164
      %s182 = sphi 0, %s182
      %s184 = sphi 0, %s182
      %s185 = sphi 0, %s184
      %s199 = sphi 0, %s185
      %s207 = sphi 0, %s209
      %s210 = sphi 0, %s207
      %s211 = sphi 0, %s210
      %s227 = sphi 0, %s211
    $region4: #{tpu_custom_call.1} parent=1 // loop_header_branch
      %25 = sbr.rel (%p23) target = $region8
    $region5: #{tpu_custom_call.1} parent=1 // loop_body
      %s27 = ssub.s32 %s22, 1
      %s28 = ssub.s32 %s22, 2
      %s35 = sadd.s32 1, %s30
      %p36 = scmp.ge.s32.totalorder %s35, 1
      %s37 = scalar_select %p36, 0, %s35
      %s38 = sadd.s32 1, %s29
      %s39 = scalar_select %p36, %s38, %s29
      %p40 = scmp.ge.s32.totalorder %s39, 2
      %s41 = scalar_select %p40, 0, %s39
      %s42 = ssub.s32 %s29, %s41
      %s43 = ssub.s32 %s30, %s37
      %s44 = sor.u32 %s42, %s43
      %p45 = scmp.eq.s32.totalorder %s44, 0
      %s47 = sadd.s32 %s46, 1
      %s48 = scalar_select %p45, %s46, %s47
      %p51 = pneg %p45
      %p52 = scmp.eq.s32.totalorder %s22, 1
      %p53 = por %p51, %p52
      %p54 = scmp.ne.s32.totalorder %s46, %s49
      %p55 = scmp.eq.s32.totalorder %s22, 0
      %p56 = por %p54, %p55
      %p57 = scmp.ne.s32.totalorder %s46, %s49
      %p58 = scmp.eq.s32.totalorder %s27, 1
      %p59 = por %p57, %p58
      %p60 = scmp.ne.s32.totalorder %s49, %s50
      %p61 = scmp.eq.s32.totalorder %s27, 0
      %p62 = por %p60, %p61
      %p63 = scmp.ne.s32.totalorder %s49, %s50
      %p64 = scmp.eq.s32.totalorder %s28, 1
      %p65 = por %p63, %p64
      %p67 = scmp.ne.s32.totalorder %s50, %s66
      %p68 = scmp.eq.s32.totalorder %s28, 0
      %p69 = por %p67, %p68
      %s70 = ssub.s32 %s29, %s41
      %s71 = ssub.s32 %s30, %s37
      %s72 = sor.u32 %s70, %s71
      %p73 = scmp.eq.s32.totalorder %s72, 0
      %s75 = sadd.s32 %s74, 1
      %s76 = scalar_select %p73, %s74, %s75
      %p79 = pneg %p73
      %p80 = scmp.eq.s32.totalorder %s22, 1
      %p81 = por %p79, %p80
      %p82 = scmp.ne.s32.totalorder %s74, %s77
      %p83 = scmp.eq.s32.totalorder %s22, 0
      %p84 = por %p82, %p83
      %p85 = scmp.ne.s32.totalorder %s74, %s77
      %p86 = scmp.eq.s32.totalorder %s27, 1
      %p87 = por %p85, %p86
      %p88 = scmp.ne.s32.totalorder %s77, %s78
      %p89 = scmp.eq.s32.totalorder %s27, 0
      %p90 = por %p88, %p89
      %p91 = scmp.ne.s32.totalorder %s77, %s78
      %p92 = scmp.eq.s32.totalorder %s28, 1
      %p93 = por %p91, %p92
      %p95 = scmp.ne.s32.totalorder %s78, %s94
      %p96 = scmp.eq.s32.totalorder %s28, 0
      %p97 = por %p95, %p96
      %s99 = sadd.s32 %s98, 1
      %p102 = scmp.eq.s32.totalorder %s22, 1
      %p103 = scmp.ne.s32.totalorder %s98, %s100
      %p104 = scmp.eq.s32.totalorder %s22, 0
      %p105 = por %p103, %p104
      %p106 = scmp.ne.s32.totalorder %s98, %s100
      %p107 = scmp.eq.s32.totalorder %s27, 1
      %p108 = por %p106, %p107
      %p109 = scmp.ne.s32.totalorder %s100, %s101
      %p110 = scmp.eq.s32.totalorder %s27, 0
      %p111 = por %p109, %p110
      %p112 = scmp.ne.s32.totalorder %s100, %s101
      %p113 = scmp.eq.s32.totalorder %s28, 1
      %p114 = por %p112, %p113
      %p116 = scmp.ne.s32.totalorder %s101, %s115
      %p117 = scmp.eq.s32.totalorder %s28, 0
      %p118 = por %p116, %p117
      %s120 = sadd.s32 %s119, 1
      %p123 = scmp.eq.s32.totalorder %s22, 1
      %p124 = scmp.ne.s32.totalorder %s119, %s121
      %p125 = scmp.eq.s32.totalorder %s22, 0
      %p126 = por %p124, %p125
      %p127 = scmp.ne.s32.totalorder %s119, %s121
      %p128 = scmp.eq.s32.totalorder %s27, 1
      %p129 = por %p127, %p128
      %p130 = scmp.ne.s32.totalorder %s121, %s122
      %p131 = scmp.eq.s32.totalorder %s27, 0
      %p132 = por %p130, %p131
      %p133 = scmp.ne.s32.totalorder %s121, %s122
      %p134 = scmp.eq.s32.totalorder %s28, 1
      %p135 = por %p133, %p134
      %p137 = scmp.ne.s32.totalorder %s122, %s136
      %p138 = scmp.eq.s32.totalorder %s28, 0
      %p139 = por %p137, %p138
      %s141 = sadd.s32 %s140, 1
      %p144 = scmp.eq.s32.totalorder %s22, 1
      %p145 = scmp.ne.s32.totalorder %s140, %s142
      %p146 = scmp.eq.s32.totalorder %s22, 0
      %p147 = por %p145, %p146
      %p148 = scmp.ne.s32.totalorder %s140, %s142
      %p149 = scmp.eq.s32.totalorder %s27, 1
      %p150 = por %p148, %p149
      %p151 = scmp.ne.s32.totalorder %s142, %s143
      %p152 = scmp.eq.s32.totalorder %s27, 0
      %p153 = por %p151, %p152
      %p154 = scmp.ne.s32.totalorder %s142, %s143
      %p155 = scmp.eq.s32.totalorder %s28, 1
      %p156 = por %p154, %p155
      %p158 = scmp.ne.s32.totalorder %s143, %s157
      %p159 = scmp.eq.s32.totalorder %s28, 0
      %p160 = por %p158, %p159
      %s162 = sadd.s32 %s161, 1
      %p165 = scmp.eq.s32.totalorder %s22, 1
      %p166 = scmp.ne.s32.totalorder %s161, %s163
      %p167 = scmp.eq.s32.totalorder %s22, 0
      %p168 = por %p166, %p167
      %p169 = scmp.ne.s32.totalorder %s161, %s163
      %p170 = scmp.eq.s32.totalorder %s27, 1
      %p171 = por %p169, %p170
      %p172 = scmp.ne.s32.totalorder %s163, %s164
      %p173 = scmp.eq.s32.totalorder %s27, 0
      %p174 = por %p172, %p173
      %p175 = scmp.ne.s32.totalorder %s163, %s164
      %p176 = scmp.eq.s32.totalorder %s28, 1
      %p177 = por %p175, %p176
      %p179 = scmp.ne.s32.totalorder %s164, %s178
      %p180 = scmp.eq.s32.totalorder %s28, 0
      %p181 = por %p179, %p180
      %s183 = sadd.s32 %s182, 1
      %p186 = scmp.eq.s32.totalorder %s22, 1
      %p187 = scmp.ne.s32.totalorder %s182, %s184
      %p188 = scmp.eq.s32.totalorder %s22, 0
      %p189 = por %p187, %p188
      %p190 = scmp.ne.s32.totalorder %s182, %s184
      %p191 = scmp.eq.s32.totalorder %s27, 1
      %p192 = por %p190, %p191
      %p193 = scmp.ne.s32.totalorder %s184, %s185
      %p194 = scmp.eq.s32.totalorder %s27, 0
      %p195 = por %p193, %p194
      %p196 = scmp.ne.s32.totalorder %s184, %s185
      %p197 = scmp.eq.s32.totalorder %s28, 1
      %p198 = por %p196, %p197
      %p200 = scmp.ne.s32.totalorder %s185, %s199
      %p201 = scmp.eq.s32.totalorder %s28, 0
      %p202 = por %p200, %p201
      %s203 = ssub.s32 %s29, %s41
      %s204 = ssub.s32 %s30, %s37
      %s205 = sor.u32 %s203, %s204
      %p206 = scmp.eq.s32.totalorder %s205, 0
      %s208 = sadd.s32 %s207, 1
      %s209 = scalar_select %p206, %s207, %s208
      %p212 = pneg %p206
      %p213 = scmp.eq.s32.totalorder %s22, 1
      %p214 = por %p212, %p213
      %p215 = scmp.ne.s32.totalorder %s207, %s210
      %p216 = scmp.eq.s32.totalorder %s22, 0
      %p217 = por %p215, %p216
      %p218 = scmp.ne.s32.totalorder %s207, %s210
      %p219 = scmp.eq.s32.totalorder %s27, 1
      %p220 = por %p218, %p219
      %p221 = scmp.ne.s32.totalorder %s210, %s211
      %p222 = scmp.eq.s32.totalorder %s27, 0
      %p223 = por %p221, %p222
      %p224 = scmp.ne.s32.totalorder %s210, %s211
      %p225 = scmp.eq.s32.totalorder %s28, 1
      %p226 = por %p224, %p225
      %p228 = scmp.ne.s32.totalorder %s211, %s227
      %p229 = scmp.eq.s32.totalorder %s28, 0
      %p230 = por %p228, %p229
      %p231 = scmp.le.s32.totalorder 1, %s22
      %p232 = scmp.lt.s32.totalorder %s22, 3
      %p233 = pnand %p231, %p232
      %p234 = pneg %p233
      // Predicated region
      $region9: #{tpu_custom_call.1} parent=5 // pred_check
        _
      $region10: #{tpu_custom_call.1} parent=5 // pred_check_branch
        %236 = sbr.rel (%p233) target = $region12
      $region11: #{tpu_custom_call.1} parent=5 // pred_region
        %s237 = ssub.s32 %s22, 1
        // Predicated region
        $region13: #{tpu_custom_call.1} parent=11 // pred_check
          %p238 = pneg %p111
        $region14: #{tpu_custom_call.1} parent=11 // pred_check_branch
          %240 = sbr.rel (%p238) target = $region16
        $region15: #{tpu_custom_call.1} parent=11 // pred_region
          _
        $region16: #{tpu_custom_call.1} parent=11 // pred_fallthru
          _
        // Predicated region
        $region17: #{tpu_custom_call.1} parent=11 // pred_check
          %p241 = pneg %p132
        $region18: #{tpu_custom_call.1} parent=11 // pred_check_branch
          %243 = sbr.rel (%p241) target = $region20
        $region19: #{tpu_custom_call.1} parent=11 // pred_region
          _
        $region20: #{tpu_custom_call.1} parent=11 // pred_fallthru
          _
        // Predicated region
        $region21: #{tpu_custom_call.1} parent=11 // pred_check
          %p244 = pneg %p153
        $region22: #{tpu_custom_call.1} parent=11 // pred_check_branch
          %246 = sbr.rel (%p244) target = $region24
        $region23: #{tpu_custom_call.1} parent=11 // pred_region
          _
        $region24: #{tpu_custom_call.1} parent=11 // pred_fallthru
          _
        // Predicated region
        $region25: #{tpu_custom_call.1} parent=11 // pred_check
          %p247 = pneg %p174
        $region26: #{tpu_custom_call.1} parent=11 // pred_check_branch
          %249 = sbr.rel (%p247) target = $region28
        $region27: #{tpu_custom_call.1} parent=11 // pred_region
          _
        $region28: #{tpu_custom_call.1} parent=11 // pred_fallthru
          _
        // Predicated region
        $region29: #{tpu_custom_call.1} parent=11 // pred_check
          %p250 = pneg %p195
        $region30: #{tpu_custom_call.1} parent=11 // pred_check_branch
          %252 = sbr.rel (%p250) target = $region32
        $region31: #{tpu_custom_call.1} parent=11 // pred_region
          _
        $region32: #{tpu_custom_call.1} parent=11 // pred_fallthru
          _
      $region12: #{tpu_custom_call.1} parent=5 // pred_fallthru
        _
      %p253 = scmp.lt.s32.totalorder %s22, 2
      // Predicated region
      $region33: #{tpu_custom_call.1} parent=5 // pred_check
        %p254 = pneg %p253
      $region34: #{tpu_custom_call.1} parent=5 // pred_check_branch
        %256 = sbr.rel (%p254) target = $region36
      $region35: #{tpu_custom_call.1} parent=5 // pred_region
        // Predicated region
        $region37: #{tpu_custom_call.1} parent=35 // pred_check
          %p257 = pneg %p56
        $region38: #{tpu_custom_call.1} parent=35 // pred_check_branch
          %259 = sbr.rel (%p257) target = $region40
        $region39: #{tpu_custom_call.1} parent=35 // pred_region
          %s260 = sand.u32 %s46, 1
          %s261 = scalar_lea.sflag [#allocation3], %s260
          %s262 = sand.u32 %s46, 1
          %s263 = smul.addr %s262, 8
          %s264 = scalar_lea.vmem [#allocation2], %s263
          %s265 = smul.u32 2, %s30
          %s267 = ssub.s32 128, 128
          %268 = vsyncadd %s261, %s267
          %s269 = smul.addr %s29, 2
          %s270 = sadd.s32 %s265, %s269
          %s271 = smul.addr %s270, 64
          %s272 = scalar_lea.hbm %s0, %s271
          %s274 = sshll.u32 %s264, 4
          %s275 = int_to_ptr.vmem [resolvable:$true] %s274
          %277 = dma.hbm_to_vmem [thread:$0]  %s272, 128, %s275, %s261
        $region40: #{tpu_custom_call.1} parent=35 // pred_fallthru
          _
        // Predicated region
        $region41: #{tpu_custom_call.1} parent=35 // pred_check
          %p278 = pneg %p84
        $region42: #{tpu_custom_call.1} parent=35 // pred_check_branch
          %280 = sbr.rel (%p278) target = $region44
        $region43: #{tpu_custom_call.1} parent=35 // pred_region
          %s281 = sand.u32 %s74, 1
          %s282 = scalar_lea.sflag [#allocation6], %s281
          %s283 = sand.u32 %s74, 1
          %s284 = smul.addr %s283, 8
          %s285 = scalar_lea.vmem [#allocation5], %s284
          %s286 = smul.u32 2, %s30
          %s288 = ssub.s32 128, 128
          %289 = vsyncadd %s282, %s288
          %s290 = smul.addr %s29, 2
          %s291 = sadd.s32 %s286, %s290
          %s292 = smul.addr %s291, 64
          %s293 = scalar_lea.hbm %s1, %s292
          %s295 = sshll.u32 %s285, 4
          %s296 = int_to_ptr.vmem [resolvable:$true] %s295
          %298 = dma.hbm_to_vmem [thread:$0]  %s293, 128, %s296, %s282
        $region44: #{tpu_custom_call.1} parent=35 // pred_fallthru
          _
      $region36: #{tpu_custom_call.1} parent=5 // pred_fallthru
        _
      %p299 = scmp.le.s32.totalorder 1, %s22
      %p300 = scmp.lt.s32.totalorder %s22, 3
      %p301 = pnand %p299, %p300
      %p302 = pneg %p301
      // Predicated region
      $region45: #{tpu_custom_call.1} parent=5 // pred_check
        _
      $region46: #{tpu_custom_call.1} parent=5 // pred_check_branch
        %304 = sbr.rel (%p301) target = $region48
      $region47: #{tpu_custom_call.1} parent=5 // pred_region
        %s305 = ssub.s32 %s22, 1
        %s306 = sand.u32 %s49, 1
        %s307 = scalar_lea.sflag [#allocation3], %s306
        %s308 = sand.u32 %s49, 1
        %s309 = smul.addr %s308, 8
        %s310 = scalar_lea.vmem [#allocation2], %s309
        // Predicated region
        $region49: #{tpu_custom_call.1} parent=47 // pred_check
          %p311 = pneg %p62
        $region50: #{tpu_custom_call.1} parent=47 // pred_check_branch
          %313 = sbr.rel (%p311) target = $region52
        $region51: #{tpu_custom_call.1} parent=47 // pred_region
          %314 = dma.done %s307, 128
        $region52: #{tpu_custom_call.1} parent=47 // pred_fallthru
          _
        %s315 = sand.u32 %s77, 1
        %s316 = scalar_lea.sflag [#allocation6], %s315
        %s317 = sand.u32 %s77, 1
        %s318 = smul.addr %s317, 8
        %s319 = scalar_lea.vmem [#allocation5], %s318
        // Predicated region
        $region53: #{tpu_custom_call.1} parent=47 // pred_check
          %p320 = pneg %p90
        $region54: #{tpu_custom_call.1} parent=47 // pred_check_branch
          %322 = sbr.rel (%p320) target = $region56
        $region55: #{tpu_custom_call.1} parent=47 // pred_region
          %323 = dma.done %s316, 128
        $region56: #{tpu_custom_call.1} parent=47 // pred_fallthru
          _
        %s324 = sand.u32 %s49, 1
        %s325 = scalar_lea.sflag [#allocation3], %s324
        %s326 = sand.u32 %s49, 1
        %s327 = smul.addr %s326, 8
        %s328 = scalar_lea.vmem [#allocation2], %s327
        %p329 = pneg %p62
        %p330 = pneg %p59
        %s331 = sand.u32 %s77, 1
        %s332 = scalar_lea.sflag [#allocation6], %s331
        %s333 = sand.u32 %s77, 1
        %s334 = smul.addr %s333, 8
        %s335 = scalar_lea.vmem [#allocation5], %s334
        %p336 = pneg %p90
        %p337 = pneg %p87
        %p338 = pneg %p111
        %p339 = pneg %p108
        %p340 = pneg %p132
        %p341 = pneg %p129
        %p342 = pneg %p153
        %p343 = pneg %p150
        %p344 = pneg %p174
        %p345 = pneg %p171
        %p346 = pneg %p195
        %p347 = pneg %p192
        %p348 = pneg %p223
        %p349 = pneg %p220
        %s350 = sand.u32 %s210, 1
        %s351 = scalar_lea.sflag [#allocation4], %s350
        %s352 = sand.u32 %s210, 1
        %s353 = smul.addr %s352, 8
        %s354 = scalar_lea.vmem [#allocation7], %s353
        %s355 = smul.u32 2, %s32
        %s356 = smul.u32 2, %s32
        %s357 = smul.u32 2, %s32
        %v358 = vld [vmem:[%s2] sm:$0xf]
        %v359 = vld [vmem:[%s3] sm:$0xf]
        %v360 = vld [vmem:[%s5] sm:$0xf]
        %v361 = vld [vmem:[%s4] sm:$0xf]
        %363 = vset.pattern.permute.xlu0 0
        %364 = vperm.xlu0 %363, %v361
        %v365 = vpop.permute.xlu0 %364
        %v367 = vld [vmem:[%s6] sm:$0xf]
        %369 = vset.pattern.permute.xlu0 0
        %370 = vperm.xlu0 %369, %v367
        %v371 = vpop.permute.xlu0 %370
        %v373 = vld [vmem:[%s310] sm:$0xff]
        %v374 = vld [vmem:[%s319] sm:$0xff]
        %v376 = vcombine.high %v374, %v374
        %vm377 = vcmask 31744
        %v379 = vsel %vm377, %v359, 0
        %vm381 = vcmask 1043456
        %v382 = vsel %vm381, %v374, 0
        %v384 = vsel %vm381, %v376, 0
        %386 = vmatprep.subr.mxu0 0.0
        %387 = vmatpush1.msra.mxu0 0.0
        %388 = vmatprep.subr.mxu0 0.0
        %389 = vmatpush1.msra.mxu0 0.0
        %390 = vmatprep.subr.mxu0 0.0
        %391 = vmatpush1.msra.mxu0 0.0
        %392 = vmatprep.subr.mxu0 0.0
        %393 = vmatpush1.msra.mxu0 0.0
        %394 = vmatprep.subr.mxu0 0.0
        %395 = vmatpush1.msra.mxu0 0.0
        %396 = vmatprep.subr.mxu0 0.0
        %397 = vmatpush1.msra.mxu0 0.0
        %398 = vmatprep.subr.mxu0 0.0
        %399 = vmatpush1.msra.mxu0 0.0
        %400 = vmatprep.subr.mxu0 0.0
        %401 = vmatpush1.msra.mxu0 0.0
        %402 = vmatprep.subr.mxu0 0.0
        %403 = vmatpush1.msra.mxu0 0.0
        %404 = vmatprep.subr.mxu0 0.0
        %405 = vmatpush1.msra.mxu0 0.0
        %406 = vmatprep.subr.mxu0 0.0
        %407 = vmatpush1.msra.mxu0 0.0
        %408 = vmatprep.subr.mxu0 0.0
        %409 = vmatpush1.msra.mxu0 0.0
        %410 = vmatprep.subr.mxu0 0.0
        %411 = vmatpush1.msra.mxu0 0.0
        %412 = vmatprep.subr.mxu0 0.0
        %413 = vmatpush1.msra.mxu0 0.0
        %414 = vmatprep.subr.mxu0 0.0
        %415 = vmatpush1.msra.mxu0 0.0
        %416 = vmatprep.subr.mxu0 %v384
        %417 = vmatpush1.msra.mxu0 %v382
        %418 = vmatprep.subr.mxu0 0.0
        %419 = vmatpush2.msra.mxu0 0.0
        %420 = vmatprep.subr.mxu0 0.0
        %421 = vmatpush2.msra.mxu0 0.0
        %422 = vmatprep.subr.mxu0 0.0
        %423 = vmatpush2.msra.mxu0 0.0
        %424 = vmatprep.subr.mxu0 0.0
        %425 = vmatpush2.msra.mxu0 0.0
        %426 = vmatprep.subr.mxu0 0.0
        %427 = vmatpush2.msra.mxu0 0.0
        %428 = vmatprep.subr.mxu0 0.0
        %429 = vmatpush2.msra.mxu0 0.0
        %430 = vmatprep.subr.mxu0 0.0
        %431 = vmatpush2.msra.mxu0 0.0
        %432 = vmatprep.subr.mxu0 0.0
        %433 = vmatpush2.msra.mxu0 0.0
        %434 = vmatprep.subr.mxu0 0.0
        %435 = vmatpush2.msra.mxu0 0.0
        %436 = vmatprep.subr.mxu0 0.0
        %437 = vmatpush2.msra.mxu0 0.0
        %438 = vmatprep.subr.mxu0 0.0
        %439 = vmatpush2.msra.mxu0 0.0
        %440 = vmatprep.subr.mxu0 0.0
        %441 = vmatpush2.msra.mxu0 0.0
        %442 = vmatprep.subr.mxu0 0.0
        %443 = vmatpush2.msra.mxu0 0.0
        %444 = vmatprep.subr.mxu0 0.0
        %445 = vmatpush2.msra.mxu0 0.0
        %446 = vmatprep.subr.mxu0 0.0
        %447 = vmatpush2.msra.mxu0 0.0
        %448 = vmatprep.subr.mxu0 0.0
        %449 = vmatpush2.msra.mxu0 0.0
        %450 = vmatprep.mubr.f32.mxu0 0.0
        %451 = vmatmul.mubr.f32.gmra.mxu0 %v379
        %v452 = vpop.f32.mrf.mxu0
        %v453 = vadd.f32 0.0, %v452
        %v454 = vpop.f32.mrf.mxu0
        %v455 = vadd.f32 0.0, %v454
        %456 = vdwg.mxu0
        %v458 = vcombine.high %v373, %v373
        %v460 = vsel %vm377, %v358, 0
        %v462 = vsel %vm381, %v373, 0
        %v464 = vsel %vm381, %v458, 0
        %466 = vmatprep.subr.mxu0 0.0
        %467 = vmatpush1.msra.mxu0 0.0
        %468 = vmatprep.subr.mxu0 0.0
        %469 = vmatpush1.msra.mxu0 0.0
        %470 = vmatprep.subr.mxu0 0.0
        %471 = vmatpush1.msra.mxu0 0.0
        %472 = vmatprep.subr.mxu0 0.0
        %473 = vmatpush1.msra.mxu0 0.0
        %474 = vmatprep.subr.mxu0 0.0
        %475 = vmatpush1.msra.mxu0 0.0
        %476 = vmatprep.subr.mxu0 0.0
        %477 = vmatpush1.msra.mxu0 0.0
        %478 = vmatprep.subr.mxu0 0.0
        %479 = vmatpush1.msra.mxu0 0.0
        %480 = vmatprep.subr.mxu0 0.0
        %481 = vmatpush1.msra.mxu0 0.0
        %482 = vmatprep.subr.mxu0 0.0
        %483 = vmatpush1.msra.mxu0 0.0
        %484 = vmatprep.subr.mxu0 0.0
        %485 = vmatpush1.msra.mxu0 0.0
        %486 = vmatprep.subr.mxu0 0.0
        %487 = vmatpush1.msra.mxu0 0.0
        %488 = vmatprep.subr.mxu0 0.0
        %489 = vmatpush1.msra.mxu0 0.0
        %490 = vmatprep.subr.mxu0 0.0
        %491 = vmatpush1.msra.mxu0 0.0
        %492 = vmatprep.subr.mxu0 0.0
        %493 = vmatpush1.msra.mxu0 0.0
        %494 = vmatprep.subr.mxu0 0.0
        %495 = vmatpush1.msra.mxu0 0.0
        %496 = vmatprep.subr.mxu0 %v464
        %497 = vmatpush1.msra.mxu0 %v462
        %498 = vmatprep.subr.mxu0 0.0
        %499 = vmatpush2.msra.mxu0 0.0
        %500 = vmatprep.subr.mxu0 0.0
        %501 = vmatpush2.msra.mxu0 0.0
        %502 = vmatprep.subr.mxu0 0.0
        %503 = vmatpush2.msra.mxu0 0.0
        %504 = vmatprep.subr.mxu0 0.0
        %505 = vmatpush2.msra.mxu0 0.0
        %506 = vmatprep.subr.mxu0 0.0
        %507 = vmatpush2.msra.mxu0 0.0
        %508 = vmatprep.subr.mxu0 0.0
        %509 = vmatpush2.msra.mxu0 0.0
        %510 = vmatprep.subr.mxu0 0.0
        %511 = vmatpush2.msra.mxu0 0.0
        %512 = vmatprep.subr.mxu0 0.0
        %513 = vmatpush2.msra.mxu0 0.0
        %514 = vmatprep.subr.mxu0 0.0
        %515 = vmatpush2.msra.mxu0 0.0
        %516 = vmatprep.subr.mxu0 0.0
        %517 = vmatpush2.msra.mxu0 0.0
        %518 = vmatprep.subr.mxu0 0.0
        %519 = vmatpush2.msra.mxu0 0.0
        %520 = vmatprep.subr.mxu0 0.0
        %521 = vmatpush2.msra.mxu0 0.0
        %522 = vmatprep.subr.mxu0 0.0
        %523 = vmatpush2.msra.mxu0 0.0
        %524 = vmatprep.subr.mxu0 0.0
        %525 = vmatpush2.msra.mxu0 0.0
        %526 = vmatprep.subr.mxu0 0.0
        %527 = vmatpush2.msra.mxu0 0.0
        %528 = vmatprep.subr.mxu0 0.0
        %529 = vmatpush2.msra.mxu0 0.0
        %530 = vmatprep.mubr.f32.mxu0 0.0
        %531 = vmatmul.mubr.f32.gmra.mxu0 %v460
        %v532 = vpop.f32.mrf.mxu0
        %v533 = vadd.f32 %v453, %v532
        %v534 = vpop.f32.mrf.mxu0
        %v535 = vadd.f32 %v455, %v534
        %536 = vdwg.mxu0
        %v537 = vadd.f32 %v533, %v365
        %v538 = vadd.f32 %v535, %v365
        %vm539 = vcmp.gt.f32.partialorder %v537, 0.0
        %vm540 = vcmp.gt.f32.partialorder %v538, 0.0
        %v541 = vmul.f32 %v537, 0.2
        %v542 = vmul.f32 %v538, 0.2
        %v543 = vsel %vm539, %v537, %v541
        %v544 = vsel %vm540, %v538, %v542
        %v546 = vsel %vm377, %v360, 0
        %v549 = vsel %vm381, %v543, 0
        %v552 = vsel %vm381, %v544, 0
        %554 = vmatprep.subr.mxu0 0.0
        %555 = vmatpush1.msra.mxu0 0.0
        %556 = vmatprep.subr.mxu0 0.0
        %557 = vmatpush1.msra.mxu0 0.0
        %558 = vmatprep.subr.mxu0 0.0
        %559 = vmatpush1.msra.mxu0 0.0
        %560 = vmatprep.subr.mxu0 0.0
        %561 = vmatpush1.msra.mxu0 0.0
        %562 = vmatprep.subr.mxu0 0.0
        %563 = vmatpush1.msra.mxu0 0.0
        %564 = vmatprep.subr.mxu0 0.0
        %565 = vmatpush1.msra.mxu0 0.0
        %566 = vmatprep.subr.mxu0 0.0
        %567 = vmatpush1.msra.mxu0 0.0
        %568 = vmatprep.subr.mxu0 0.0
        %569 = vmatpush1.msra.mxu0 0.0
        %570 = vmatprep.subr.mxu0 0.0
        %571 = vmatpush1.msra.mxu0 0.0
        %572 = vmatprep.subr.mxu0 0.0
        %573 = vmatpush1.msra.mxu0 0.0
        %574 = vmatprep.subr.mxu0 0.0
        %575 = vmatpush1.msra.mxu0 0.0
        %576 = vmatprep.subr.mxu0 0.0
        %577 = vmatpush1.msra.mxu0 0.0
        %578 = vmatprep.subr.mxu0 0.0
        %579 = vmatpush1.msra.mxu0 0.0
        %580 = vmatprep.subr.mxu0 0.0
        %581 = vmatpush1.msra.mxu0 0.0
        %582 = vmatprep.subr.mxu0 0.0
        %583 = vmatpush1.msra.mxu0 0.0
        %584 = vmatprep.subr.mxu0 %v552
        %585 = vmatpush1.msra.mxu0 %v549
        %586 = vmatprep.subr.mxu0 0.0
        %587 = vmatpush2.msra.mxu0 0.0
        %588 = vmatprep.subr.mxu0 0.0
        %589 = vmatpush2.msra.mxu0 0.0
        %590 = vmatprep.subr.mxu0 0.0
        %591 = vmatpush2.msra.mxu0 0.0
        %592 = vmatprep.subr.mxu0 0.0
        %593 = vmatpush2.msra.mxu0 0.0
        %594 = vmatprep.subr.mxu0 0.0
        %595 = vmatpush2.msra.mxu0 0.0
        %596 = vmatprep.subr.mxu0 0.0
        %597 = vmatpush2.msra.mxu0 0.0
        %598 = vmatprep.subr.mxu0 0.0
        %599 = vmatpush2.msra.mxu0 0.0
        %600 = vmatprep.subr.mxu0 0.0
        %601 = vmatpush2.msra.mxu0 0.0
        %602 = vmatprep.subr.mxu0 0.0
        %603 = vmatpush2.msra.mxu0 0.0
        %604 = vmatprep.subr.mxu0 0.0
        %605 = vmatpush2.msra.mxu0 0.0
        %606 = vmatprep.subr.mxu0 0.0
        %607 = vmatpush2.msra.mxu0 0.0
        %608 = vmatprep.subr.mxu0 0.0
        %609 = vmatpush2.msra.mxu0 0.0
        %610 = vmatprep.subr.mxu0 0.0
        %611 = vmatpush2.msra.mxu0 0.0
        %612 = vmatprep.subr.mxu0 0.0
        %613 = vmatpush2.msra.mxu0 0.0
        %614 = vmatprep.subr.mxu0 0.0
        %615 = vmatpush2.msra.mxu0 0.0
        %616 = vmatprep.subr.mxu0 0.0
        %617 = vmatpush2.msra.mxu0 0.0
        %618 = vmatprep.mubr.f32.mxu0 0.0
        %619 = vmatmul.mubr.f32.gmra.mxu0 %v546
        %v620 = vpop.f32.mrf.mxu0
        %v621 = vadd.f32 %v371, %v620
        %v622 = vpop.f32.mrf.mxu0
        %v623 = vadd.f32 %v371, %v622
        %624 = vdwg.mxu0
        %v625 = vxor.u32 %v621, 2147483648
        %v626 = vxor.u32 %v623, 2147483648
        %v627 = vmul.f32 %v625, 1.442695
        %v628 = vpow.pop %v627
        %v629 = vmul.f32 %v626, 1.442695
        %v630 = vpow.pop %v629
        %v631 = vadd.f32 %v628, 1.0
        %v632 = vadd.f32 %v630, 1.0
        %v633 = vrcp.pop %v631
        %v634 = vmul.f32 1.0, %v633
        %v635 = vrcp.pop %v632
        %v636 = vmul.f32 1.0, %v635
        %v638 = vmul.f32 %v634, %v373
        %v639 = vmul.f32 %v636, %v458
        %v642 = vcombine.low %v638, %v639
        %644 = vst [vmem:[%s354] sm:$0xff] %v642
        %s645 = sand.u32 %s210, 1
        %s646 = scalar_lea.sflag [#allocation4], %s645
        %s647 = sand.u32 %s210, 1
        %s648 = smul.addr %s647, 8
        %s649 = scalar_lea.vmem [#allocation7], %s648
        // Predicated region
        $region57: #{tpu_custom_call.1} parent=47 // pred_check
          %p650 = pneg %p220
        $region58: #{tpu_custom_call.1} parent=47 // pred_check_branch
          %652 = sbr.rel (%p650) target = $region60
        $region59: #{tpu_custom_call.1} parent=47 // pred_region
          %s653 = smul.u32 2, %s32
          %s655 = ssub.s32 128, 128
          %656 = vsyncadd %s646, %s655
          %s657 = smul.addr %s31, 2
          %s658 = sadd.s32 %s653, %s657
          %s659 = smul.addr %s658, 64
          %s660 = scalar_lea.hbm %s7, %s659
          %s662 = sshll.u32 %s649, 4
          %s663 = int_to_ptr.vmem [resolvable:$true] %s662
          %665 = dma.vmem_to_hbm [thread:$0]  %s663, 128, %s660, %s646
        $region60: #{tpu_custom_call.1} parent=47 // pred_fallthru
          _
      $region48: #{tpu_custom_call.1} parent=5 // pred_fallthru
        _
      %p666 = scmp.le.s32.totalorder 2, %s22
      // Predicated region
      $region61: #{tpu_custom_call.1} parent=5 // pred_check
        %p667 = pneg %p666
      $region62: #{tpu_custom_call.1} parent=5 // pred_check_branch
        %669 = sbr.rel (%p667) target = $region64
      $region63: #{tpu_custom_call.1} parent=5 // pred_region
        %s670 = ssub.s32 %s22, 2
        // Predicated region
        $region65: #{tpu_custom_call.1} parent=63 // pred_check
          %p671 = pneg %p226
        $region66: #{tpu_custom_call.1} parent=63 // pred_check_branch
          %673 = sbr.rel (%p671) target = $region68
        $region67: #{tpu_custom_call.1} parent=63 // pred_region
          %s674 = sand.u32 %s211, 1
          %s675 = scalar_lea.sflag [#allocation4], %s674
          %s676 = sand.u32 %s211, 1
          %s677 = smul.addr %s676, 8
          %s678 = scalar_lea.vmem [#allocation7], %s677
          %679 = dma.done %s675, 128
        $region68: #{tpu_custom_call.1} parent=63 // pred_fallthru
          _
      $region64: #{tpu_custom_call.1} parent=5 // pred_fallthru
        _
    $region6: #{tpu_custom_call.1} parent=1 // loop_footer
      %s26 = sadd.s32 1, %s22
    $region7: #{tpu_custom_call.1} parent=1 // loop_footer_branch
      %21 = sbr.rel target = $region3
    $region8: #{tpu_custom_call.1} parent=1 // loop_exit
      _
    %680 = vsyncpa [#allocation3], 1
    %s681 = scalar_lea.sflag [#allocation3], 1
    %682 = vsyncpa %s681, 1
    %683 = vsyncpa [#allocation6], 1
    %s684 = scalar_lea.sflag [#allocation6], 1
    %685 = vsyncpa %s684, 1
    %686 = vsyncpa [#allocation4], 1
    %s687 = scalar_lea.sflag [#allocation4], 1
    %688 = vsyncpa %s687, 1

</llo_original>
